<compile_context>
chip_gen: v5e
topology: v5e:2x2
jax: 0.10.0
libtpu: 0.0.40
codegen_flags: <defaults>
</compile_context>

<pallas_src>
import functools

import jax
import jax.numpy as jnp
from jax.experimental import pallas as pl
from jax.experimental.pallas import tpu as pltpu


def _basis_expansion_kernel(w_ref, basis_ref, out_ref):
    # w_ref:     (1, D)   bf16 in VMEM (resident across all N tiles)
    # basis_ref: (D, TN)  bf16 in VMEM (streamed tile of the flattened basis)
    # out_ref:   (1, TN)  f32  in VMEM (lane-dense output tile)
    out_ref[...] = jnp.dot(
        w_ref[...], basis_ref[...], preferred_element_type=jnp.float32
    )


def _round_up(x: int, m: int) -> int:
    return ((x + m - 1) // m) * m


def _choose_tn(d: int, n: int,
               dtype_bytes: int = 2,
               per_buffer_budget: int = 6 * 1024 * 1024) -> int:
    """Pick the N tile width: multiple of 128, <= 2048, and small enough that a
    double-buffered (D, TN) basis tile fits comfortably in scoped VMEM on every
    generation (v5e 16 MiB default .. v7x 64 MiB physical)."""
    tn = per_buffer_budget // max(d * dtype_bytes, 1)
    tn = max(128, min(2048, (tn // 128) * 128))
    # No point making the tile wider than the (lane-padded) full axis.
    return min(tn, max(128, _round_up(n, 128)))


def prepare_basis(sampled_basis: jax.Array, filter_shape: tuple) -> jax.Array:
    """One-time setup (outside the per-forward hot path): validate shapes and
    flatten the constant (D, c_out, c_in, kH, kW) basis into a (D, N) bf16
    matrix streamed by the kernel."""
    if tuple(sampled_basis.shape[1:]) != tuple(filter_shape):
        raise ValueError(
            f"filter_shape {filter_shape} does not match sampled_basis shape "
            f"{sampled_basis.shape[1:]}"
        )
    c_out, c_in, kh, kw = filter_shape
    d = sampled_basis.shape[0]
    n = c_out * c_in * kh * kw
    return sampled_basis.reshape(d, n).astype(jnp.bfloat16)


@functools.partial(jax.jit, static_argnames=("filter_shape",))
def basis_expansion(weights: jax.Array,
                    basis_2d: jax.Array,
                    filter_shape: tuple) -> jax.Array:
    """Expand the basis: weights (D,) x basis_2d (D, N) -> filter
    (c_out, c_in, kH, kW), with N = c_out * c_in * kH * kW."""
    c_out, c_in, kh, kw = filter_shape
    d, n = basis_2d.shape
    if weights.shape != (d,):
        raise ValueError(f"weights shape {weights.shape} != ({d},)")
    if n != c_out * c_in * kh * kw:
        raise ValueError(f"basis N={n} does not match filter_shape {filter_shape}")

    tn = _choose_tn(d, n)
    grid_n = pl.cdiv(n, tn)

    w_row = weights.reshape(1, d).astype(jnp.bfloat16)

    out = pl.pallas_call(
        _basis_expansion_kernel,
        out_shape=jax.ShapeDtypeStruct((1, n), jnp.float32),
        grid_spec=pltpu.PrefetchScalarGridSpec(
            num_scalar_prefetch=0,
            grid=(grid_n,),
            in_specs=[
                # Tiny weight row, same block every step -> stays resident.
                pl.BlockSpec((1, d), lambda j: (0, 0)),
                # Basis streamed tile-by-tile along N (auto double-buffered).
                pl.BlockSpec((d, tn), lambda j: (0, j)),
            ],
            out_specs=pl.BlockSpec((1, tn), lambda j: (0, j)),
        ),
        compiler_params=pltpu.CompilerParams(
            # Tiles along N are independent -> shard across TCs on v7x.
            dimension_semantics=("parallel",),
        ),
    )(w_row, basis_2d)

    return out[0].reshape(c_out, c_in, kh, kw)


if __name__ == "__main__":
    # Small, deterministic synthetic basis (stand-in for a concrete
    # BasisExpansion subclass' pre-sampled steerable basis).
    key = jax.random.PRNGKey(0)
    k_basis, k_weights = jax.random.split(key)

    D = 16            # basis dimensionality (number of learnable weights)
    c_out, c_in = 4, 4
    kernel_size = 5   # spatial filter size (kH = kW = 5)
    filter_shape = (c_out, c_in, kernel_size, kernel_size)

    sampled_basis = jax.random.normal(
        k_basis, (D,) + filter_shape, dtype=jnp.float32
    )
    weights = jax.random.normal(k_weights, (D,), dtype=jnp.float32)

    # One-time setup (constant buffer in e2cnn): flatten + cast to bf16.
    basis_2d = prepare_basis(sampled_basis, filter_shape)

    filt = basis_expansion(weights, basis_2d, filter_shape)
    filt = jax.block_until_ready(filt)
    assert filt.shape == filter_shape

    # Primary check: same bf16-streamed operands, f32 accumulation (what the
    # kernel actually computes) -> tight tolerance.
    ref_bf16 = jnp.einsum(
        "b,bn->n",
        weights.astype(jnp.bfloat16).astype(jnp.float32),
        basis_2d.astype(jnp.float32),
    ).reshape(filter_shape)
    assert jnp.allclose(filt, ref_bf16, atol=1e-3, rtol=1e-3)

    # Sanity check vs the full-f32 expansion (bounded bf16 streaming error).
    ref_f32 = jnp.einsum("b,boihw->oihw", weights, sampled_basis)
    assert jnp.allclose(filt, ref_f32, atol=1e-1, rtol=1e-1)

    print("KERNEL_OK")
</pallas_src>

<mosaic_0001>
module attributes {stable_mosaic.version = 11 : i64} {
  func.func @_basis_expansion_kernel(%arg0: i32, %arg1: memref<1x16xbf16, #tpu.memory_space<vmem>>, %arg2: memref<16x512xbf16, #tpu.memory_space<vmem>>, %arg3: memref<1x512xf32, #tpu.memory_space<vmem>>) attributes {dimension_semantics = [#tpu.dimension_semantics<parallel>], iteration_bounds = array<i64: 1>, scalar_prefetch = 0 : i64, scratch_operands = 0 : i64, tpu.core_type = #tpu.core_type<tc>, window_params = [{pipeline_mode = #tpu.pipeline_mode<synchronous>, transform_indices = @transform_0, window_bounds = array<i64: 1, 16>}, {transform_indices = @transform_1, window_bounds = array<i64: 16, 512>}, {transform_indices = @transform_2, window_bounds = array<i64: 1, 512>}]} {
    %c0 = arith.constant 0 : index
    %c0_0 = arith.constant 0 : index
    %0 = vector.load %arg1[%c0, %c0_0] : memref<1x16xbf16, #tpu.memory_space<vmem>>, vector<1x16xbf16>
    %c0_1 = arith.constant 0 : index
    %c0_2 = arith.constant 0 : index
    %1 = vector.load %arg2[%c0_1, %c0_2] : memref<16x512xbf16, #tpu.memory_space<vmem>>, vector<16x512xbf16>
    %cst = arith.constant dense<0.000000e+00> : vector<1x512xf32>
    %2 = tpu.matmul %0, %1, %cst {dimension_numbers = #tpu.dot_dimension_numbers<[1], [0], [0], [1], [0, 0, 1, 1], [], []>} : vector<1x16xbf16>, vector<16x512xbf16>, vector<1x512xf32> -> vector<1x512xf32>
    %c0_3 = arith.constant 0 : index
    %c0_4 = arith.constant 0 : index
    %3 = vector.load %arg3[%c0_3, %c0_4] : memref<1x512xf32, #tpu.memory_space<vmem>>, vector<1x512xf32>
    tpu.vector_store %arg3[%c0_3, %c0_4], %2 {strides = array<i32>} : memref<1x512xf32, #tpu.memory_space<vmem>>, vector<1x512xf32>,
    return
  }
  func.func @transform_0(%arg0: i32) -> (i32, i32) {
    %c0_i32 = arith.constant 0 : i32
    %c0_i32_0 = arith.constant 0 : i32
    %c0_i32_1 = arith.constant 0 : i32
    return %c0_i32, %c0_i32_0 : i32, i32
  }
  func.func @transform_1(%arg0: i32) -> (i32, i32) {
    %c0_i32 = arith.constant 0 : i32
    %c0_i32_0 = arith.constant 0 : i32
    return %c0_i32, %arg0 : i32, i32
  }
  func.func @transform_2(%arg0: i32) -> (i32, i32) {
    %c0_i32 = arith.constant 0 : i32
    %c0_i32_0 = arith.constant 0 : i32
    return %c0_i32, %arg0 : i32, i32
  }
}

</mosaic_0001>

<llo_original>
// kernel: squeeze.1
$region0: #{squeeze.1}
  %s0 = inlined_call_operand.vmem [shape: f32[400], index: 0, kind: input, shape index: {}]
  %s1 = inlined_call_operand.vmem [shape: f32[4,4,5,5], index: 1, kind: output, shape index: {}]
  $region1: #{squeeze.1} parent=0
    #allocation0 [shape = 'u8[4096]{0}', space=vmem, size = 0x1000, scoped, tag = 'scoped mem for input reshape']
    %s3 = ssub.s32 16, 1
    %v4 = vld [vmem:[%s0] sm:%s3]
    %5 = vst [vmem:[#allocation0] sm:%s3] %v4
    %v6 = vld [vmem:[#allocation0] sm:$0x1]
    %vm7 = vcmask 39936
    %8 = vst.msk [vmem:[%s1] sm:$0x1] %vm7, %v6
    %s9 = scalar_lea.vmem [#allocation0], 3
    %v10 = vld [vmem:[%s9] sm:$0x1]
    %11 = vrot.lane.b32.xlu0 %v10, 127
    %v12 = vpop.permute.xlu0 %11
    %vm13 = vcmask 39936
    %s14 = scalar_lea.vmem %s1, 122
    %15 = vst.msk [vmem:[%s14] sm:$0x1] %vm13, %v12
    %s16 = scalar_lea.vmem [#allocation0], 1
    %v17 = vld [vmem:[%s16] sm:$0x1]
    %18 = vrot.lane.b32.xlu0 %v17, 126
    %v19 = vpop.permute.xlu0 %18
    %vm20 = vcmask 39936
    %s21 = scalar_lea.vmem %s1, 41
    %22 = vst.msk [vmem:[%s21] sm:$0x1] %vm20, %v19
    %s23 = scalar_lea.vmem [#allocation0], 2
    %v24 = vld [vmem:[%s23] sm:$0x1]
    %25 = vrot.lane.b32.xlu0 %v24, 124
    %v26 = vpop.permute.xlu0 %25
    %vm27 = vcmask 39936
    %s28 = scalar_lea.vmem %s1, 82
    %29 = vst.msk [vmem:[%s28] sm:$0x1] %vm27, %v26
    %v30 = vld [vmem:[#allocation0] sm:$0x1]
    %31 = vrot.lane.b32.xlu0 %v30, 123
    %v32 = vpop.permute.xlu0 %31
    %vm33 = vcmask 39936
    %s34 = scalar_lea.vmem %s1, 1
    %35 = vst.msk [vmem:[%s34] sm:$0x1] %vm33, %v32
    %s36 = scalar_lea.vmem [#allocation0], 3
    %v37 = vld [vmem:[%s36] sm:$0x1]
    %38 = vrot.lane.b32.xlu0 %v37, 122
    %v39 = vpop.permute.xlu0 %38
    %vm40 = vcmask 39936
    %s41 = scalar_lea.vmem %s1, 123
    %42 = vst.msk [vmem:[%s41] sm:$0x1] %vm40, %v39
    %s43 = scalar_lea.vmem [#allocation0], 1
    %v44 = vld [vmem:[%s43] sm:$0x1]
    %45 = vrot.lane.b32.xlu0 %v44, 121
    %v46 = vpop.permute.xlu0 %45
    %vm47 = vcmask 39936
    %s48 = scalar_lea.vmem %s1, 42
    %49 = vst.msk [vmem:[%s48] sm:$0x1] %vm47, %v46
    %s50 = scalar_lea.vmem [#allocation0], 2
    %v51 = vld [vmem:[%s50] sm:$0x1]
    %52 = vrot.lane.b32.xlu0 %v51, 119
    %v53 = vpop.permute.xlu0 %52
    %vm54 = vcmask 39936
    %s55 = scalar_lea.vmem %s1, 83
    %56 = vst.msk [vmem:[%s55] sm:$0x1] %vm54, %v53
    %v57 = vld [vmem:[#allocation0] sm:$0x1]
    %58 = vrot.lane.b32.xlu0 %v57, 118
    %v59 = vpop.permute.xlu0 %58
    %vm60 = vcmask 39936
    %s61 = scalar_lea.vmem %s1, 2
    %62 = vst.msk [vmem:[%s61] sm:$0x1] %vm60, %v59
    %s63 = scalar_lea.vmem [#allocation0], 3
    %v64 = vld [vmem:[%s63] sm:$0x1]
    %65 = vrot.lane.b32.xlu0 %v64, 117
    %v66 = vpop.permute.xlu0 %65
    %vm67 = vcmask 39936
    %s68 = scalar_lea.vmem %s1, 124
    %69 = vst.msk [vmem:[%s68] sm:$0x1] %vm67, %v66
    %s70 = scalar_lea.vmem [#allocation0], 1
    %v71 = vld [vmem:[%s70] sm:$0x1]
    %72 = vrot.lane.b32.xlu0 %v71, 116
    %v73 = vpop.permute.xlu0 %72
    %vm74 = vcmask 39936
    %s75 = scalar_lea.vmem %s1, 43
    %76 = vst.msk [vmem:[%s75] sm:$0x1] %vm74, %v73
    %s77 = scalar_lea.vmem [#allocation0], 2
    %v78 = vld [vmem:[%s77] sm:$0x1]
    %79 = vrot.lane.b32.xlu0 %v78, 114
    %v80 = vpop.permute.xlu0 %79
    %vm81 = vcmask 39936
    %s82 = scalar_lea.vmem %s1, 84
    %83 = vst.msk [vmem:[%s82] sm:$0x1] %vm81, %v80
    %v84 = vld [vmem:[#allocation0] sm:$0x1]
    %85 = vrot.lane.b32.xlu0 %v84, 113
    %v86 = vpop.permute.xlu0 %85
    %vm87 = vcmask 39936
    %s88 = scalar_lea.vmem %s1, 3
    %89 = vst.msk [vmem:[%s88] sm:$0x1] %vm87, %v86
    %s90 = scalar_lea.vmem [#allocation0], 1
    %v91 = vld [vmem:[%s90] sm:$0x1]
    %92 = vrot.lane.b32.xlu0 %v91, 111
    %v93 = vpop.permute.xlu0 %92
    %vm94 = vcmask 39936
    %s95 = scalar_lea.vmem %s1, 44
    %96 = vst.msk [vmem:[%s95] sm:$0x1] %vm94, %v93
    %s97 = scalar_lea.vmem [#allocation0], 2
    %v98 = vld [vmem:[%s97] sm:$0x1]
    %99 = vrot.lane.b32.xlu0 %v98, 109
    %v100 = vpop.permute.xlu0 %99
    %vm101 = vcmask 39936
    %s102 = scalar_lea.vmem %s1, 88
    %103 = vst.msk [vmem:[%s102] sm:$0x1] %vm101, %v100
    %v104 = vld [vmem:[#allocation0] sm:$0x1]
    %105 = vrot.lane.b32.xlu0 %v104, 108
    %v106 = vpop.permute.xlu0 %105
    %vm107 = vcmask 39936
    %s108 = scalar_lea.vmem %s1, 4
    %109 = vst.msk [vmem:[%s108] sm:$0x1] %vm107, %v106
    %s110 = scalar_lea.vmem [#allocation0], 1
    %v111 = vld [vmem:[%s110] sm:$0x1]
    %112 = vrot.lane.b32.xlu0 %v111, 106
    %v113 = vpop.permute.xlu0 %112
    %vm114 = vcmask 39936
    %s115 = scalar_lea.vmem %s1, 48
    %116 = vst.msk [vmem:[%s115] sm:$0x1] %vm114, %v113
    %s117 = scalar_lea.vmem [#allocation0], 2
    %v118 = vld [vmem:[%s117] sm:$0x1]
    %119 = vrot.lane.b32.xlu0 %v118, 104
    %v120 = vpop.permute.xlu0 %119
    %vm121 = vcmask 39936
    %s122 = scalar_lea.vmem %s1, 89
    %123 = vst.msk [vmem:[%s122] sm:$0x1] %vm121, %v120
    %v124 = vld [vmem:[#allocation0] sm:$0x1]
    %125 = vrot.lane.b32.xlu0 %v124, 103
    %v126 = vpop.permute.xlu0 %125
    %vm127 = vcmask 39936
    %s128 = scalar_lea.vmem %s1, 8
    %129 = vst.msk [vmem:[%s128] sm:$0x1] %vm127, %v126
    %s130 = scalar_lea.vmem [#allocation0], 1
    %v131 = vld [vmem:[%s130] sm:$0x1]
    %132 = vrot.lane.b32.xlu0 %v131, 101
    %v133 = vpop.permute.xlu0 %132
    %vm134 = vcmask 39936
    %s135 = scalar_lea.vmem %s1, 49
    %136 = vst.msk [vmem:[%s135] sm:$0x1] %vm134, %v133
    %s137 = scalar_lea.vmem [#allocation0], 2
    %v138 = vld [vmem:[%s137] sm:$0x1]
    %139 = vrot.lane.b32.xlu0 %v138, 99
    %v140 = vpop.permute.xlu0 %139
    %vm141 = vcmask 39936
    %s142 = scalar_lea.vmem %s1, 90
    %143 = vst.msk [vmem:[%s142] sm:$0x1] %vm141, %v140
    %v144 = vld [vmem:[#allocation0] sm:$0x1]
    %145 = vrot.lane.b32.xlu0 %v144, 98
    %v146 = vpop.permute.xlu0 %145
    %vm147 = vcmask 39936
    %s148 = scalar_lea.vmem %s1, 9
    %149 = vst.msk [vmem:[%s148] sm:$0x1] %vm147, %v146
    %s150 = scalar_lea.vmem [#allocation0], 1
    %v151 = vld [vmem:[%s150] sm:$0x1]
    %152 = vrot.lane.b32.xlu0 %v151, 96
    %v153 = vpop.permute.xlu0 %152
    %vm154 = vcmask 39936
    %s155 = scalar_lea.vmem %s1, 50
    %156 = vst.msk [vmem:[%s155] sm:$0x1] %vm154, %v153
    %s157 = scalar_lea.vmem [#allocation0], 2
    %v158 = vld [vmem:[%s157] sm:$0x1]
    %159 = vrot.lane.b32.xlu0 %v158, 94
    %v160 = vpop.permute.xlu0 %159
    %vm161 = vcmask 39936
    %s162 = scalar_lea.vmem %s1, 91
    %163 = vst.msk [vmem:[%s162] sm:$0x1] %vm161, %v160
    %v164 = vld [vmem:[#allocation0] sm:$0x1]
    %165 = vrot.lane.b32.xlu0 %v164, 93
    %v166 = vpop.permute.xlu0 %165
    %vm167 = vcmask 39936
    %s168 = scalar_lea.vmem %s1, 10
    %169 = vst.msk [vmem:[%s168] sm:$0x1] %vm167, %v166
    %s170 = scalar_lea.vmem [#allocation0], 1
    %v171 = vld [vmem:[%s170] sm:$0x1]
    %172 = vrot.lane.b32.xlu0 %v171, 91
    %v173 = vpop.permute.xlu0 %172
    %vm174 = vcmask 39936
    %s175 = scalar_lea.vmem %s1, 51
    %176 = vst.msk [vmem:[%s175] sm:$0x1] %vm174, %v173
    %s177 = scalar_lea.vmem [#allocation0], 2
    %v178 = vld [vmem:[%s177] sm:$0x1]
    %179 = vrot.lane.b32.xlu0 %v178, 89
    %v180 = vpop.permute.xlu0 %179
    %vm181 = vcmask 39936
    %s182 = scalar_lea.vmem %s1, 92
    %183 = vst.msk [vmem:[%s182] sm:$0x1] %vm181, %v180
    %v184 = vld [vmem:[#allocation0] sm:$0x1]
    %185 = vrot.lane.b32.xlu0 %v184, 88
    %v186 = vpop.permute.xlu0 %185
    %vm187 = vcmask 39936
    %s188 = scalar_lea.vmem %s1, 11
    %189 = vst.msk [vmem:[%s188] sm:$0x1] %vm187, %v186
    %s190 = scalar_lea.vmem [#allocation0], 1
    %v191 = vld [vmem:[%s190] sm:$0x1]
    %192 = vrot.lane.b32.xlu0 %v191, 86
    %v193 = vpop.permute.xlu0 %192
    %vm194 = vcmask 39936
    %s195 = scalar_lea.vmem %s1, 52
    %196 = vst.msk [vmem:[%s195] sm:$0x1] %vm194, %v193
    %s197 = scalar_lea.vmem [#allocation0], 2
    %v198 = vld [vmem:[%s197] sm:$0x1]
    %199 = vrot.lane.b32.xlu0 %v198, 84
    %v200 = vpop.permute.xlu0 %199
    %vm201 = vcmask 39936
    %s202 = scalar_lea.vmem %s1, 96
    %203 = vst.msk [vmem:[%s202] sm:$0x1] %vm201, %v200
    %v204 = vld [vmem:[#allocation0] sm:$0x1]
    %205 = vrot.lane.b32.xlu0 %v204, 83
    %v206 = vpop.permute.xlu0 %205
    %vm207 = vcmask 39936
    %s208 = scalar_lea.vmem %s1, 12
    %209 = vst.msk [vmem:[%s208] sm:$0x1] %vm207, %v206
    %s210 = scalar_lea.vmem [#allocation0], 1
    %v211 = vld [vmem:[%s210] sm:$0x1]
    %212 = vrot.lane.b32.xlu0 %v211, 81
    %v213 = vpop.permute.xlu0 %212
    %vm214 = vcmask 39936
    %s215 = scalar_lea.vmem %s1, 56
    %216 = vst.msk [vmem:[%s215] sm:$0x1] %vm214, %v213
    %s217 = scalar_lea.vmem [#allocation0], 2
    %v218 = vld [vmem:[%s217] sm:$0x1]
    %219 = vrot.lane.b32.xlu0 %v218, 79
    %v220 = vpop.permute.xlu0 %219
    %vm221 = vcmask 39936
    %s222 = scalar_lea.vmem %s1, 97
    %223 = vst.msk [vmem:[%s222] sm:$0x1] %vm221, %v220
    %v224 = vld [vmem:[#allocation0] sm:$0x1]
    %225 = vrot.lane.b32.xlu0 %v224, 78
    %v226 = vpop.permute.xlu0 %225
    %vm227 = vcmask 39936
    %s228 = scalar_lea.vmem %s1, 16
    %229 = vst.msk [vmem:[%s228] sm:$0x1] %vm227, %v226
    %s230 = scalar_lea.vmem [#allocation0], 1
    %v231 = vld [vmem:[%s230] sm:$0x1]
    %232 = vrot.lane.b32.xlu0 %v231, 76
    %v233 = vpop.permute.xlu0 %232
    %vm234 = vcmask 39936
    %s235 = scalar_lea.vmem %s1, 57
    %236 = vst.msk [vmem:[%s235] sm:$0x1] %vm234, %v233
    %s237 = scalar_lea.vmem [#allocation0], 2
    %v238 = vld [vmem:[%s237] sm:$0x1]
    %239 = vrot.lane.b32.xlu0 %v238, 74
    %v240 = vpop.permute.xlu0 %239
    %vm241 = vcmask 39936
    %s242 = scalar_lea.vmem %s1, 98
    %243 = vst.msk [vmem:[%s242] sm:$0x1] %vm241, %v240
    %v244 = vld [vmem:[#allocation0] sm:$0x1]
    %245 = vrot.lane.b32.xlu0 %v244, 73
    %v246 = vpop.permute.xlu0 %245
    %vm247 = vcmask 39936
    %s248 = scalar_lea.vmem %s1, 17
    %249 = vst.msk [vmem:[%s248] sm:$0x1] %vm247, %v246
    %s250 = scalar_lea.vmem [#allocation0], 1
    %v251 = vld [vmem:[%s250] sm:$0x1]
    %252 = vrot.lane.b32.xlu0 %v251, 71
    %v253 = vpop.permute.xlu0 %252
    %vm254 = vcmask 39936
    %s255 = scalar_lea.vmem %s1, 58
    %256 = vst.msk [vmem:[%s255] sm:$0x1] %vm254, %v253
    %s257 = scalar_lea.vmem [#allocation0], 2
    %v258 = vld [vmem:[%s257] sm:$0x1]
    %259 = vrot.lane.b32.xlu0 %v258, 69
    %v260 = vpop.permute.xlu0 %259
    %vm261 = vcmask 39936
    %s262 = scalar_lea.vmem %s1, 99
    %263 = vst.msk [vmem:[%s262] sm:$0x1] %vm261, %v260
    %v264 = vld [vmem:[#allocation0] sm:$0x1]
    %265 = vrot.lane.b32.xlu0 %v264, 68
    %v266 = vpop.permute.xlu0 %265
    %vm267 = vcmask 39936
    %s268 = scalar_lea.vmem %s1, 18
    %269 = vst.msk [vmem:[%s268] sm:$0x1] %vm267, %v266
    %s270 = scalar_lea.vmem [#allocation0], 1
    %v271 = vld [vmem:[%s270] sm:$0x1]
    %272 = vrot.lane.b32.xlu0 %v271, 66
    %v273 = vpop.permute.xlu0 %272
    %vm274 = vcmask 39936
    %s275 = scalar_lea.vmem %s1, 59
    %276 = vst.msk [vmem:[%s275] sm:$0x1] %vm274, %v273
    %s277 = scalar_lea.vmem [#allocation0], 2
    %v278 = vld [vmem:[%s277] sm:$0x1]
    %279 = vrot.lane.b32.xlu0 %v278, 64
    %v280 = vpop.permute.xlu0 %279
    %vm281 = vcmask 39936
    %s282 = scalar_lea.vmem %s1, 100
    %283 = vst.msk [vmem:[%s282] sm:$0x1] %vm281, %v280
    %v284 = vld [vmem:[#allocation0] sm:$0x1]
    %285 = vrot.lane.b32.xlu0 %v284, 63
    %v286 = vpop.permute.xlu0 %285
    %vm287 = vcmask 39936
    %s288 = scalar_lea.vmem %s1, 19
    %289 = vst.msk [vmem:[%s288] sm:$0x1] %vm287, %v286
    %s290 = scalar_lea.vmem [#allocation0], 1
    %v291 = vld [vmem:[%s290] sm:$0x1]
    %292 = vrot.lane.b32.xlu0 %v291, 61
    %v293 = vpop.permute.xlu0 %292
    %vm294 = vcmask 39936
    %s295 = scalar_lea.vmem %s1, 60
    %296 = vst.msk [vmem:[%s295] sm:$0x1] %vm294, %v293
    %s297 = scalar_lea.vmem [#allocation0], 2
    %v298 = vld [vmem:[%s297] sm:$0x1]
    %299 = vrot.lane.b32.xlu0 %v298, 59
    %v300 = vpop.permute.xlu0 %299
    %vm301 = vcmask 39936
    %s302 = scalar_lea.vmem %s1, 104
    %303 = vst.msk [vmem:[%s302] sm:$0x1] %vm301, %v300
    %v304 = vld [vmem:[#allocation0] sm:$0x1]
    %305 = vrot.lane.b32.xlu0 %v304, 58
    %v306 = vpop.permute.xlu0 %305
    %vm307 = vcmask 39936
    %s308 = scalar_lea.vmem %s1, 20
    %309 = vst.msk [vmem:[%s308] sm:$0x1] %vm307, %v306
    %s310 = scalar_lea.vmem [#allocation0], 1
    %v311 = vld [vmem:[%s310] sm:$0x1]
    %312 = vrot.lane.b32.xlu0 %v311, 56
    %v313 = vpop.permute.xlu0 %312
    %vm314 = vcmask 39936
    %s315 = scalar_lea.vmem %s1, 64
    %316 = vst.msk [vmem:[%s315] sm:$0x1] %vm314, %v313
    %s317 = scalar_lea.vmem [#allocation0], 2
    %v318 = vld [vmem:[%s317] sm:$0x1]
    %319 = vrot.lane.b32.xlu0 %v318, 54
    %v320 = vpop.permute.xlu0 %319
    %vm321 = vcmask 39936
    %s322 = scalar_lea.vmem %s1, 105
    %323 = vst.msk [vmem:[%s322] sm:$0x1] %vm321, %v320
    %v324 = vld [vmem:[#allocation0] sm:$0x1]
    %325 = vrot.lane.b32.xlu0 %v324, 53
    %v326 = vpop.permute.xlu0 %325
    %vm327 = vcmask 39936
    %s328 = scalar_lea.vmem %s1, 24
    %329 = vst.msk [vmem:[%s328] sm:$0x1] %vm327, %v326
    %s330 = scalar_lea.vmem [#allocation0], 1
    %v331 = vld [vmem:[%s330] sm:$0x1]
    %332 = vrot.lane.b32.xlu0 %v331, 51
    %v333 = vpop.permute.xlu0 %332
    %vm334 = vcmask 39936
    %s335 = scalar_lea.vmem %s1, 65
    %336 = vst.msk [vmem:[%s335] sm:$0x1] %vm334, %v333
    %s337 = scalar_lea.vmem [#allocation0], 2
    %v338 = vld [vmem:[%s337] sm:$0x1]
    %339 = vrot.lane.b32.xlu0 %v338, 49
    %v340 = vpop.permute.xlu0 %339
    %vm341 = vcmask 39936
    %s342 = scalar_lea.vmem %s1, 106
    %343 = vst.msk [vmem:[%s342] sm:$0x1] %vm341, %v340
    %v344 = vld [vmem:[#allocation0] sm:$0x1]
    %345 = vrot.lane.b32.xlu0 %v344, 48
    %v346 = vpop.permute.xlu0 %345
    %vm347 = vcmask 39936
    %s348 = scalar_lea.vmem %s1, 25
    %349 = vst.msk [vmem:[%s348] sm:$0x1] %vm347, %v346
    %s350 = scalar_lea.vmem [#allocation0], 1
    %v351 = vld [vmem:[%s350] sm:$0x1]
    %352 = vrot.lane.b32.xlu0 %v351, 46
    %v353 = vpop.permute.xlu0 %352
    %vm354 = vcmask 39936
    %s355 = scalar_lea.vmem %s1, 66
    %356 = vst.msk [vmem:[%s355] sm:$0x1] %vm354, %v353
    %s357 = scalar_lea.vmem [#allocation0], 2
    %v358 = vld [vmem:[%s357] sm:$0x1]
    %359 = vrot.lane.b32.xlu0 %v358, 44
    %v360 = vpop.permute.xlu0 %359
    %vm361 = vcmask 39936
    %s362 = scalar_lea.vmem %s1, 107
    %363 = vst.msk [vmem:[%s362] sm:$0x1] %vm361, %v360
    %v364 = vld [vmem:[#allocation0] sm:$0x1]
    %365 = vrot.lane.b32.xlu0 %v364, 43
    %v366 = vpop.permute.xlu0 %365
    %vm367 = vcmask 39936
    %s368 = scalar_lea.vmem %s1, 26
    %369 = vst.msk [vmem:[%s368] sm:$0x1] %vm367, %v366
    %s370 = scalar_lea.vmem [#allocation0], 1
    %v371 = vld [vmem:[%s370] sm:$0x1]
    %372 = vrot.lane.b32.xlu0 %v371, 41
    %v373 = vpop.permute.xlu0 %372
    %vm374 = vcmask 39936
    %s375 = scalar_lea.vmem %s1, 67
    %376 = vst.msk [vmem:[%s375] sm:$0x1] %vm374, %v373
    %s377 = scalar_lea.vmem [#allocation0], 2
    %v378 = vld [vmem:[%s377] sm:$0x1]
    %379 = vrot.lane.b32.xlu0 %v378, 39
    %v380 = vpop.permute.xlu0 %379
    %vm381 = vcmask 39936
    %s382 = scalar_lea.vmem %s1, 108
    %383 = vst.msk [vmem:[%s382] sm:$0x1] %vm381, %v380
    %v384 = vld [vmem:[#allocation0] sm:$0x1]
    %385 = vrot.lane.b32.xlu0 %v384, 38
    %v386 = vpop.permute.xlu0 %385
    %vm387 = vcmask 39936
    %s388 = scalar_lea.vmem %s1, 27
    %389 = vst.msk [vmem:[%s388] sm:$0x1] %vm387, %v386
    %s390 = scalar_lea.vmem [#allocation0], 1
    %v391 = vld [vmem:[%s390] sm:$0x1]
    %392 = vrot.lane.b32.xlu0 %v391, 36
    %v393 = vpop.permute.xlu0 %392
    %vm394 = vcmask 39936
    %s395 = scalar_lea.vmem %s1, 68
    %396 = vst.msk [vmem:[%s395] sm:$0x1] %vm394, %v393
    %s397 = scalar_lea.vmem [#allocation0], 2
    %v398 = vld [vmem:[%s397] sm:$0x1]
    %399 = vrot.lane.b32.xlu0 %v398, 34
    %v400 = vpop.permute.xlu0 %399
    %vm401 = vcmask 39936
    %s402 = scalar_lea.vmem %s1, 112
    %403 = vst.msk [vmem:[%s402] sm:$0x1] %vm401, %v400
    %v404 = vld [vmem:[#allocation0] sm:$0x1]
    %405 = vrot.lane.b32.xlu0 %v404, 33
    %v406 = vpop.permute.xlu0 %405
    %vm407 = vcmask 39936
    %s408 = scalar_lea.vmem %s1, 28
    %409 = vst.msk [vmem:[%s408] sm:$0x1] %vm407, %v406
    %s410 = scalar_lea.vmem [#allocation0], 1
    %v411 = vld [vmem:[%s410] sm:$0x1]
    %412 = vrot.lane.b32.xlu0 %v411, 31
    %v413 = vpop.permute.xlu0 %412
    %vm414 = vcmask 39936
    %s415 = scalar_lea.vmem %s1, 72
    %416 = vst.msk [vmem:[%s415] sm:$0x1] %vm414, %v413
    %s417 = scalar_lea.vmem [#allocation0], 2
    %v418 = vld [vmem:[%s417] sm:$0x1]
    %419 = vrot.lane.b32.xlu0 %v418, 29
    %v420 = vpop.permute.xlu0 %419
    %vm421 = vcmask 39936
    %s422 = scalar_lea.vmem %s1, 113
    %423 = vst.msk [vmem:[%s422] sm:$0x1] %vm421, %v420
    %v424 = vld [vmem:[#allocation0] sm:$0x1]
    %425 = vrot.lane.b32.xlu0 %v424, 28
    %v426 = vpop.permute.xlu0 %425
    %vm427 = vcmask 39936
    %s428 = scalar_lea.vmem %s1, 32
    %429 = vst.msk [vmem:[%s428] sm:$0x1] %vm427, %v426
    %s430 = scalar_lea.vmem [#allocation0], 1
    %v431 = vld [vmem:[%s430] sm:$0x1]
    %432 = vrot.lane.b32.xlu0 %v431, 26
    %v433 = vpop.permute.xlu0 %432
    %vm434 = vcmask 39936
    %s435 = scalar_lea.vmem %s1, 73
    %436 = vst.msk [vmem:[%s435] sm:$0x1] %vm434, %v433
    %s437 = scalar_lea.vmem [#allocation0], 2
    %v438 = vld [vmem:[%s437] sm:$0x1]
    %439 = vrot.lane.b32.xlu0 %v438, 24
    %v440 = vpop.permute.xlu0 %439
    %vm441 = vcmask 39936
    %s442 = scalar_lea.vmem %s1, 114
    %443 = vst.msk [vmem:[%s442] sm:$0x1] %vm441, %v440
    %v444 = vld [vmem:[#allocation0] sm:$0x1]
    %445 = vrot.lane.b32.xlu0 %v444, 23
    %v446 = vpop.permute.xlu0 %445
    %vm447 = vcmask 39936
    %s448 = scalar_lea.vmem %s1, 33
    %449 = vst.msk [vmem:[%s448] sm:$0x1] %vm447, %v446
    %s450 = scalar_lea.vmem [#allocation0], 1
    %v451 = vld [vmem:[%s450] sm:$0x1]
    %452 = vrot.lane.b32.xlu0 %v451, 21
    %v453 = vpop.permute.xlu0 %452
    %vm454 = vcmask 39936
    %s455 = scalar_lea.vmem %s1, 74
    %456 = vst.msk [vmem:[%s455] sm:$0x1] %vm454, %v453
    %s457 = scalar_lea.vmem [#allocation0], 2
    %v458 = vld [vmem:[%s457] sm:$0x1]
    %459 = vrot.lane.b32.xlu0 %v458, 19
    %v460 = vpop.permute.xlu0 %459
    %vm461 = vcmask 39936
    %s462 = scalar_lea.vmem %s1, 115
    %463 = vst.msk [vmem:[%s462] sm:$0x1] %vm461, %v460
    %v464 = vld [vmem:[#allocation0] sm:$0x1]
    %465 = vrot.lane.b32.xlu0 %v464, 18
    %v466 = vpop.permute.xlu0 %465
    %vm467 = vcmask 39936
    %s468 = scalar_lea.vmem %s1, 34
    %469 = vst.msk [vmem:[%s468] sm:$0x1] %vm467, %v466
    %s470 = scalar_lea.vmem [#allocation0], 1
    %v471 = vld [vmem:[%s470] sm:$0x1]
    %472 = vrot.lane.b32.xlu0 %v471, 16
    %v473 = vpop.permute.xlu0 %472
    %vm474 = vcmask 39936
    %s475 = scalar_lea.vmem %s1, 75
    %476 = vst.msk [vmem:[%s475] sm:$0x1] %vm474, %v473
    %s477 = scalar_lea.vmem [#allocation0], 2
    %v478 = vld [vmem:[%s477] sm:$0x1]
    %479 = vrot.lane.b32.xlu0 %v478, 14
    %v480 = vpop.permute.xlu0 %479
    %vm481 = vcmask 39936
    %s482 = scalar_lea.vmem %s1, 116
    %483 = vst.msk [vmem:[%s482] sm:$0x1] %vm481, %v480
    %v484 = vld [vmem:[#allocation0] sm:$0x1]
    %485 = vrot.lane.b32.xlu0 %v484, 13
    %v486 = vpop.permute.xlu0 %485
    %vm487 = vcmask 39936
    %s488 = scalar_lea.vmem %s1, 35
    %489 = vst.msk [vmem:[%s488] sm:$0x1] %vm487, %v486
    %s490 = scalar_lea.vmem [#allocation0], 1
    %v491 = vld [vmem:[%s490] sm:$0x1]
    %492 = vrot.lane.b32.xlu0 %v491, 11
    %v493 = vpop.permute.xlu0 %492
    %vm494 = vcmask 39936
    %s495 = scalar_lea.vmem %s1, 76
    %496 = vst.msk [vmem:[%s495] sm:$0x1] %vm494, %v493
    %s497 = scalar_lea.vmem [#allocation0], 2
    %v498 = vld [vmem:[%s497] sm:$0x1]
    %499 = vrot.lane.b32.xlu0 %v498, 9
    %v500 = vpop.permute.xlu0 %499
    %vm501 = vcmask 39936
    %s502 = scalar_lea.vmem %s1, 120
    %503 = vst.msk [vmem:[%s502] sm:$0x1] %vm501, %v500
    %v504 = vld [vmem:[#allocation0] sm:$0x1]
    %505 = vrot.lane.b32.xlu0 %v504, 8
    %v506 = vpop.permute.xlu0 %505
    %vm507 = vcmask 39936
    %s508 = scalar_lea.vmem %s1, 36
    %509 = vst.msk [vmem:[%s508] sm:$0x1] %vm507, %v506
    %s510 = scalar_lea.vmem [#allocation0], 1
    %v511 = vld [vmem:[%s510] sm:$0x1]
    %512 = vrot.lane.b32.xlu0 %v511, 6
    %v513 = vpop.permute.xlu0 %512
    %vm514 = vcmask 39936
    %s515 = scalar_lea.vmem %s1, 80
    %516 = vst.msk [vmem:[%s515] sm:$0x1] %vm514, %v513
    %s517 = scalar_lea.vmem [#allocation0], 2
    %v518 = vld [vmem:[%s517] sm:$0x1]
    %s519 = scalar_lea.vmem [#allocation0], 3
    %v520 = vld [vmem:[%s519] sm:$0x1]
    %vm521 = vcmask 1014784
    %v522 = vsel %vm521, %v520, %v518
    %523 = vrot.lane.b32.xlu0 %v522, 4
    %v524 = vpop.permute.xlu0 %523
    %vm525 = vcmask 31744
    %s526 = scalar_lea.vmem %s1, 121
    %527 = vst.msk [vmem:[%s526] sm:$0x1] %vm525, %v524
    %vm528 = vcmask 39968
    %s529 = scalar_lea.vmem %s1, 121
    %530 = vst.msk [vmem:[%s529] sm:$0x1] %vm528, %v524
    %v531 = vld [vmem:[#allocation0] sm:$0x1]
    %s532 = scalar_lea.vmem [#allocation0], 1
    %v533 = vld [vmem:[%s532] sm:$0x1]
    %vm534 = vcmask 1022976
    %v535 = vsel %vm534, %v533, %v531
    %536 = vrot.lane.b32.xlu0 %v535, 3
    %v537 = vpop.permute.xlu0 %536
    %vm538 = vcmask 23552
    %s539 = scalar_lea.vmem %s1, 40
    %540 = vst.msk [vmem:[%s539] sm:$0x1] %vm538, %v537
    %vm541 = vcmask 39960
    %s542 = scalar_lea.vmem %s1, 40
    %543 = vst.msk [vmem:[%s542] sm:$0x1] %vm541, %v537
    %s544 = scalar_lea.vmem [#allocation0], 1
    %v545 = vld [vmem:[%s544] sm:$0x1]
    %s546 = scalar_lea.vmem [#allocation0], 2
    %v547 = vld [vmem:[%s546] sm:$0x1]
    %vm548 = vcmask 1039360
    %v549 = vsel %vm548, %v547, %v545
    %550 = vrot.lane.b32.xlu0 %v549, 1
    %v551 = vpop.permute.xlu0 %550
    %vm552 = vcmask 7168
    %s553 = scalar_lea.vmem %s1, 81
    %554 = vst.msk [vmem:[%s553] sm:$0x1] %vm552, %v551
    %vm555 = vcmask 39944
    %s556 = scalar_lea.vmem %s1, 81
    %557 = vst.msk [vmem:[%s556] sm:$0x1] %vm555, %v551

// kernel: basis_expansion.1
$region0: #{basis_expansion.1}
  #allocation0 [shape = 'u32[]', space=smem, size = 0x4, offset = 0x4, fixed_abs, tag = 'smem constant byte address 0x4 - core index']
  #allocation1 [shape = 'u32[72,128]{1,0:T(1,128)}', space=vmem, size = 0x9000, scoped, tag = 'internal scratch']
  %s0 = inlined_call_operand.vmem [shape: bf16[1,16], index: 0, kind: input, shape index: {}]
  %s1 = inlined_call_operand.hbm [shape: bf16[16,400], index: 1, kind: input, shape index: {}]
  %s2 = inlined_call_operand.vmem [shape: f32[1,400], index: 2, kind: output, shape index: {}]
  %s3 = sld [smem:[#allocation0]]
  $region22: #{basis_expansion.1} parent=0
    _
  %s5 = ssub.s32 1, %s3
  %s6 = scalar_select 0, %s5, %s3
  $region1: #{basis_expansion.1} parent=0
    #allocation2 [shape = 'u8[16384]{0}', space=vmem, size = 0x4000, scoped, tag = 'input window, operand 1, single buffered']
    #allocation3 [shape = 's32[1]{0}', space=sflag, size = 0x4, scoped, tag = 'scoped memory for basis_expansion.1']
    %7 = vsyncpa [#allocation3], 0
    // Predicated region
    $region2: #{basis_expansion.1} parent=1 // pred_check
      _
    $region3: #{basis_expansion.1} parent=1 // pred_check_branch
      %9 = sbr.rel (0) target = $region5
    $region4: #{basis_expansion.1} parent=1 // pred_region
      _
    $region5: #{basis_expansion.1} parent=1 // pred_fallthru
      _
    // Predicated region
    $region6: #{basis_expansion.1} parent=1 // pred_check
      _
    $region7: #{basis_expansion.1} parent=1 // pred_check_branch
      %11 = sbr.rel (0) target = $region9
    $region8: #{basis_expansion.1} parent=1 // pred_region
      %13 = vsyncadd [#allocation3], 0
      %s14 = sshll.u32 %s1, 4
      %s15 = int_to_ptr.hbm [resolvable:$true] %s14
      %s16 = sshll.u32 [#allocation2], 4
      %s17 = int_to_ptr.vmem [resolvable:$true] %s16
      %22 = dma.hbm_to_vmem [thread:$0]  %s15, 512, %s17, [#allocation3], 256, 256, 16
    $region9: #{basis_expansion.1} parent=1 // pred_fallthru
      _
    // Predicated region
    $region10: #{basis_expansion.1} parent=1 // pred_check
      _
    $region11: #{basis_expansion.1} parent=1 // pred_check_branch
      %24 = sbr.rel (0) target = $region13
    $region12: #{basis_expansion.1} parent=1 // pred_region
      %26 = dma.done [#allocation3], 512
    $region13: #{basis_expansion.1} parent=1 // pred_fallthru
      _
    %v28 = vld [vmem:[%s0] sm:$0x1]
    %v29 = vld [vmem:[#allocation2] sm:$0xff]
    %v30 = vld [vmem:[#allocation2 + $0x8] sm:$0xff]
    %v31 = vld [vmem:[#allocation2 + $0x10] sm:$0xff]
    %v32 = vld [vmem:[#allocation2 + $0x18] sm:$0xff]
    %v37 = vunpack.c.l.b16 %v29
    %v38 = vunpack.c.h.b16 %v29
    %v39 = vunpack.c.l.b16 %v30
    %v40 = vunpack.c.h.b16 %v30
    %v41 = vunpack.c.l.b16 %v31
    %v42 = vunpack.c.h.b16 %v31
    %v43 = vunpack.c.l.b16 %v32
    %v44 = vunpack.c.h.b16 %v32
    %v45 = vpack.c.b16 %v41, %v37
    %v46 = vpack.c.b16 %v42, %v38
    %v47 = vpack.c.b16 %v43, %v39
    %v48 = vpack.c.b16 %v44, %v40
    %vm53 = vcmask 130048
    %v55 = vsel %vm53, %v28, 0
    %57 = vmatpush.bf16.msra.mxu0 0
    %58 = vmatpush.bf16.msra.mxu0 0
    %59 = vmatpush.bf16.msra.mxu0 0
    %60 = vmatpush.bf16.msra.mxu0 0
    %61 = vmatpush.bf16.msra.mxu0 0
    %62 = vmatpush.bf16.msra.mxu0 0
    %63 = vmatpush.bf16.msra.mxu0 0
    %64 = vmatpush.bf16.msra.mxu0 %v45
    %65 = vmatmul.bf16.gmra.mxu0 %v55
    %v66 = vpop.f32.mrf.mxu0
    %v67 = vadd.f32 0.0, %v66
    %v68 = vpop.f32.mrf.mxu0
    %69 = vdwg.mxu0
    %70 = vmatpush.bf16.msra.mxu0 0
    %71 = vmatpush.bf16.msra.mxu0 0
    %72 = vmatpush.bf16.msra.mxu0 0
    %73 = vmatpush.bf16.msra.mxu0 0
    %74 = vmatpush.bf16.msra.mxu0 0
    %75 = vmatpush.bf16.msra.mxu0 0
    %76 = vmatpush.bf16.msra.mxu0 0
    %77 = vmatpush.bf16.msra.mxu0 %v46
    %78 = vmatmul.bf16.gmra.mxu0 %v55
    %v79 = vpop.f32.mrf.mxu0
    %v80 = vadd.f32 0.0, %v79
    %v81 = vpop.f32.mrf.mxu0
    %82 = vdwg.mxu0
    %83 = vmatpush.bf16.msra.mxu0 0
    %84 = vmatpush.bf16.msra.mxu0 0
    %85 = vmatpush.bf16.msra.mxu0 0
    %86 = vmatpush.bf16.msra.mxu0 0
    %87 = vmatpush.bf16.msra.mxu0 0
    %88 = vmatpush.bf16.msra.mxu0 0
    %89 = vmatpush.bf16.msra.mxu0 0
    %90 = vmatpush.bf16.msra.mxu0 %v47
    %91 = vmatmul.bf16.gmra.mxu0 %v55
    %v92 = vpop.f32.mrf.mxu0
    %v93 = vadd.f32 0.0, %v92
    %v94 = vpop.f32.mrf.mxu0
    %95 = vdwg.mxu0
    %96 = vmatpush.bf16.msra.mxu0 0
    %97 = vmatpush.bf16.msra.mxu0 0
    %98 = vmatpush.bf16.msra.mxu0 0
    %99 = vmatpush.bf16.msra.mxu0 0
    %100 = vmatpush.bf16.msra.mxu0 0
    %101 = vmatpush.bf16.msra.mxu0 0
    %102 = vmatpush.bf16.msra.mxu0 0
    %103 = vmatpush.bf16.msra.mxu0 %v48
    %104 = vmatmul.bf16.gmra.mxu0 %v55
    %v105 = vpop.f32.mrf.mxu0
    %v106 = vadd.f32 0.0, %v105
    %v107 = vpop.f32.mrf.mxu0
    %108 = vdwg.mxu0
    %v113 = vrot.slane %v80, 7
    %v114 = vrot.slane %v93, 6
    %v115 = vrot.slane %v106, 5
    %vm116 = vcmask 1040384
    %v117 = vsel %vm116, %v67, %v113
    %vm118 = vcmask 1042434
    %v119 = vsel %vm118, %v114, %v115
    %vm120 = vcmask 1041408
    %v121 = vsel %vm120, %v117, %v119
    %v123 = vlaneseq
    %vm124 = vcmp.ge.s32.totalorder %v123, 0
    %vm125 = vcmp.lt.s32.totalorder %v123, 512
    %vm126 = vmand %vm124, %vm125
    %127 = vst.msk [vmem:[%s2] sm:$0xf] %vm126, %v121
    // Predicated region
    $region14: #{basis_expansion.1} parent=1 // pred_check
      _
    $region15: #{basis_expansion.1} parent=1 // pred_check_branch
      %129 = sbr.rel (0) target = $region17
    $region16: #{basis_expansion.1} parent=1 // pred_region
      _
    $region17: #{basis_expansion.1} parent=1 // pred_fallthru
      _
    // Predicated region
    $region18: #{basis_expansion.1} parent=1 // pred_check
      _
    $region19: #{basis_expansion.1} parent=1 // pred_check_branch
      %131 = sbr.rel (0) target = $region21
    $region20: #{basis_expansion.1} parent=1 // pred_region
      _
    $region21: #{basis_expansion.1} parent=1 // pred_fallthru
      _
    %132 = vsyncpa [#allocation3], 1

</llo_original>
